<compile_context>
chip_gen: v6e
topology: v6e:2x2x1
jax: 0.10.0
libtpu: 0.0.40
codegen_flags: <defaults>
</compile_context>

<pallas_src>
import functools

import jax
import jax.numpy as jnp
from jax.experimental import pallas as pl
from jax.experimental.pallas import tpu as pltpu


# --------------------------------------------------------------------------- #
# Kernel
# --------------------------------------------------------------------------- #
def _dynamic_coupling_kernel(
    betas_ref, taus_ref,                 # [TBr, W]   streamed (W = lane_pack * T)
    alpha_ref, gamma_ref, delta_ref,     # [1, W]     resident
    wtop_ref, wbot_ref, bpk_ref,         # [W, 3W], [W, 3W], [1, 3W]  resident
    w2_ref, b2_ref,                      # [2W, W], [1, W]            resident
    coupled_ref, weights_ref,            # [TBr, W]   streamed outputs
    *, width,
):
    betas = betas_ref[...].astype(jnp.float32)
    taus = taus_ref[...].astype(jnp.float32)

    # One fused accumulation chain on the MXU: y = [ h_pre | controller_logits ].
    y = jnp.dot(betas, wtop_ref[...], preferred_element_type=jnp.float32)
    y = y + jnp.dot(taus, wbot_ref[...], preferred_element_type=jnp.float32)
    y = y + bpk_ref[...]
    h_pre = y[:, : 2 * width]            # 128-lane aligned split when width == 128
    logits = y[:, 2 * width:]

    # coupling_controller: Linear(((betas+taus)/2)) -> Sigmoid  (0.5 folded into W)
    w = jax.nn.sigmoid(logits)

    # LinearCoupling: alpha * beta + gamma * tau + delta
    lin = alpha_ref[...] * betas + gamma_ref[...] * taus + delta_ref[...]

    # NonlinearCoupling: ReLU -> Linear(2T, T) -> Tanh   (block-diagonal packed)
    h = jnp.maximum(h_pre, 0.0)
    nonlin = jnp.tanh(
        jnp.dot(h, w2_ref[...], preferred_element_type=jnp.float32) + b2_ref[...]
    )

    # Convex blend, folded into a single FMA chain: w*lin + (1-w)*nonlin.
    coupled = nonlin + w * (lin - nonlin)
    coupled_ref[...] = coupled.astype(coupled_ref.dtype)
    weights_ref[...] = w.astype(weights_ref.dtype)


# --------------------------------------------------------------------------- #
# Tiling helpers
# --------------------------------------------------------------------------- #
def _vmem_capacity_bytes():
    try:
        return int(pltpu.get_tpu_info().vmem_capacity_bytes)
    except Exception:
        return 64 * 1024 * 1024          # conservative default (v7x per-core VMEM)


def _sublane_quantum(itemsize):
    return 8 if itemsize >= 4 else (16 if itemsize == 2 else 32)


def _pick_batch_tile(batch, n_thresholds, itemsize, row_pack):
    """Logical-row batch tile: multi-MiB stream buffers within a per-gen VMEM budget."""
    vmem_cap = _vmem_capacity_bytes()
    # 4 streamed arrays (betas, taus, coupled, weights) x 2 pipeline buffers each,
    # kept within ~40% of VMEM; individual stream buffers capped at 4 MiB.
    per_stream = max(64 * 1024, min(4 * 1024 * 1024, (vmem_cap * 2 // 5) // 8))
    row_bytes = n_thresholds * itemsize
    quant = _sublane_quantum(itemsize) * row_pack   # packed sublane-dim alignment
    tb = max(quant, (per_stream // row_bytes) // quant * quant)
    # Keep at least 2 grid steps (v7x megacore) whenever the batch allows it.
    while pl.cdiv(batch, tb) < 2 and tb > quant:
        smaller = max(quant, (tb // 2) // quant * quant)
        if smaller == tb:
            break
        tb = smaller
    return tb


# --------------------------------------------------------------------------- #
# One-time parameter packing
# --------------------------------------------------------------------------- #
def pack_params(raw, *, lane_pack=None):
    """One-time parameter transform for the fused lane-packed kernel.

    raw: dict with wc [T,T], bc [1,T], alpha/gamma/delta [1,T],
         w1 [2T,2T], b1 [1,2T], w2 [2T,T], b2 [1,T]  (x @ W convention).
    Requires input_dim == n_thresholds (the features=None path of the module).
    """
    T = raw["alpha"].shape[-1]
    assert raw["wc"].shape == (T, T), (
        "fused packing assumes input_dim == n_thresholds (features=None path)")
    if lane_pack is None:
        lane_pack = 128 // T if (T <= 128 and 128 % T == 0) else 1
    R = int(lane_pack)

    eye = jnp.eye(R, dtype=jnp.float32)

    def bd(w):                            # block-diagonal: [a,b] -> [R*a, R*b]
        return jnp.kron(eye, w.astype(jnp.float32))

    def rowtile(b):                       # [1,k] -> [1, R*k]
        return jnp.tile(b.astype(jnp.float32), (1, R))

    w1_top = raw["w1"][:T, :]             # rows acting on betas   [T, 2T]
    w1_bot = raw["w1"][T:, :]             # rows acting on taus    [T, 2T]
    # x_cat @ [Wc;Wc]*0.5 == ((betas + taus)/2) @ Wc ; 0.5 folded into W only.
    wc_half = 0.5 * raw["wc"]

    w_top = jnp.concatenate([bd(w1_top), bd(wc_half)], axis=1)   # [R*T, 3*R*T]
    w_bot = jnp.concatenate([bd(w1_bot), bd(wc_half)], axis=1)   # [R*T, 3*R*T]
    b_pk = jnp.concatenate([rowtile(raw["b1"]), rowtile(raw["bc"])], axis=1)

    return {
        "n_thresholds": T,
        "lane_pack": R,
        "alpha": raw["alpha"], "gamma": raw["gamma"], "delta": raw["delta"],
        "alpha_t": rowtile(raw["alpha"]),
        "gamma_t": rowtile(raw["gamma"]),
        "delta_t": rowtile(raw["delta"]),
        "w_top": w_top, "w_bot": w_bot, "b_packed": b_pk,
        "w2": bd(raw["w2"]), "b2": rowtile(raw["b2"]),
    }


# --------------------------------------------------------------------------- #
# Forward wrapper
# --------------------------------------------------------------------------- #
def dynamic_coupling_forward(gpcm_betas, coral_taus, packed_params, *,
                             batch_tile=None, return_interaction_features=False):
    """DynamicCoupling forward pass in a single batch-tiled Pallas kernel.

    gpcm_betas, coral_taus: [B, T] (f32 or bf16; math is f32 inside the kernel).
    packed_params: output of pack_params().
    Returns (coupled [B, T], info dict) mirroring the PyTorch module.
    """
    # TODO(synk): external `features` input (input_dim != n_thresholds) is not
    # supported by the fused weight packing; only the features=None path is.
    B, T = gpcm_betas.shape
    p = packed_params
    assert p["n_thresholds"] == T, "packed params built for a different n_thresholds"
    R = p["lane_pack"]
    width = R * T

    io_dtype = gpcm_betas.dtype
    itemsize = jnp.dtype(io_dtype).itemsize
    quant = _sublane_quantum(itemsize) * R

    if batch_tile is not None:
        TB = max(quant, (int(batch_tile) // quant) * quant)
    else:
        TB = _pick_batch_tile(B, T, itemsize, R)

    # Pad (instead of raising) so any B works; padded rows are discarded below.
    Bp = pl.cdiv(B, TB) * TB
    betas, taus = gpcm_betas, coral_taus
    if Bp != B:
        pad = ((0, Bp - B), (0, 0))
        betas = jnp.pad(betas, pad)
        taus = jnp.pad(taus, pad)

    # Free (row-major metadata) reshape into the lane-packed layout.
    Bpr, TBr = Bp // R, TB // R
    betas_p = betas.reshape(Bpr, width)
    taus_p = taus.reshape(Bpr, width)

    grid = (Bpr // TBr,)

    stream_spec = pl.BlockSpec((TBr, width), lambda i: (i, 0))

    def resident(a):
        return pl.BlockSpec(a.shape, lambda i: (0, 0))

    inputs = (
        betas_p, taus_p,
        p["alpha_t"], p["gamma_t"], p["delta_t"],
        p["w_top"], p["w_bot"], p["b_packed"],
        p["w2"], p["b2"],
    )
    in_specs = [stream_spec, stream_spec] + [resident(a) for a in inputs[2:]]

    weight_bytes = sum(int(a.size) * a.dtype.itemsize for a in inputs[2:])
    cost = pl.CostEstimate(
        flops=int(Bp) * (4 * T * 3 * T + 4 * T * T + 8 * T),
        transcendentals=int(Bp) * 2 * T,
        bytes_accessed=4 * int(Bp) * T * itemsize + weight_bytes,
    )

    vmem_cap = _vmem_capacity_bytes()
    vmem_limit = int(min(vmem_cap * 3 // 4, 96 * 1024 * 1024))

    coupled_p, weights_p = pl.pallas_call(
        functools.partial(_dynamic_coupling_kernel, width=width),
        out_shape=(jax.ShapeDtypeStruct((Bpr, width), io_dtype),
                   jax.ShapeDtypeStruct((Bpr, width), io_dtype)),
        grid=grid,
        in_specs=in_specs,
        out_specs=(stream_spec, stream_spec),
        compiler_params=pltpu.CompilerParams(
            dimension_semantics=("parallel",),
            vmem_limit_bytes=vmem_limit,
        ),
        cost_estimate=cost,
    )(*inputs)

    coupled = coupled_p.reshape(Bp, T)[:B]
    weights = weights_p.reshape(Bp, T)[:B]

    info = {
        "coupling_weights": weights,
        "linear_info": {
            "alpha": p["alpha"][0],
            "gamma": p["gamma"][0],
            "delta": p["delta"][0],
        },
        "nonlinear_info": {
            # Only materialized on request: it's a pure copy of the inputs and
            # would otherwise add an extra HBM pass to a memory-bound op.
            "interaction_features": (
                jnp.concatenate([gpcm_betas, coral_taus], axis=-1)
                if return_interaction_features else None),
        },
    }
    return coupled, info


# --------------------------------------------------------------------------- #
# Deterministic init + pure-JAX reference
# --------------------------------------------------------------------------- #
def init_params(key, n_thresholds, input_dim):
    """Deterministic synthetic parameter init (nn.Linear-style uniform), raw layout."""
    T = n_thresholds
    ks = jax.random.split(key, 6)

    def linear_init(k, fan_in, shape):
        bound = 1.0 / jnp.sqrt(fan_in)
        return jax.random.uniform(k, shape, jnp.float32, minval=-bound, maxval=bound)

    wc = linear_init(ks[0], input_dim, (input_dim, T))     # controller Linear(input_dim, T)
    bc = linear_init(ks[1], input_dim, (1, T))
    alpha = jnp.ones((1, T), jnp.float32)                  # LinearCoupling init values
    gamma = jnp.ones((1, T), jnp.float32)
    delta = jnp.zeros((1, T), jnp.float32)
    w1 = linear_init(ks[2], 2 * T, (2 * T, 2 * T))         # NonlinearCoupling layer 1
    b1 = linear_init(ks[3], 2 * T, (1, 2 * T))
    w2 = linear_init(ks[4], 2 * T, (2 * T, T))             # NonlinearCoupling layer 2
    b2 = linear_init(ks[5], 2 * T, (1, T))

    return {"wc": wc, "bc": bc, "alpha": alpha, "gamma": gamma, "delta": delta,
            "w1": w1, "b1": b1, "w2": w2, "b2": b2}


def _reference_forward(gpcm_betas, coral_taus, raw):
    """Pure-JAX reference mirroring the PyTorch forward (unpacked weights)."""
    features = (gpcm_betas + coral_taus) / 2.0
    w = jax.nn.sigmoid(features @ raw["wc"] + raw["bc"])
    lin = raw["alpha"] * gpcm_betas + raw["gamma"] * coral_taus + raw["delta"]
    x_cat = jnp.concatenate([gpcm_betas, coral_taus], axis=-1)
    h = jax.nn.relu(x_cat @ raw["w1"] + raw["b1"])
    nonlin = jnp.tanh(h @ raw["w2"] + raw["b2"])
    return w * lin + (1.0 - w) * nonlin, w


# --------------------------------------------------------------------------- #
# Demo / correctness check
# --------------------------------------------------------------------------- #
if __name__ == "__main__":
    B = 256            # batch (small demo; kernel tiles/pipelines for large B)
    T = 8              # n_thresholds  (lane_pack = 128 // 8 = 16 packed rows/vreg row)
    INPUT_DIM = T      # features=None path => input_dim == n_thresholds

    key = jax.random.PRNGKey(0)
    k_beta, k_tau, k_param = jax.random.split(key, 3)

    gpcm_betas = jax.random.normal(k_beta, (B, T), jnp.float32)
    coral_taus = jax.random.normal(k_tau, (B, T), jnp.float32)

    raw_params = init_params(k_param, T, INPUT_DIM)
    packed_params = pack_params(raw_params)          # one-time transform

    # f32 streamed I/O; batch_tile=128 exercises a 2-step "parallel" grid.
    coupled, info = dynamic_coupling_forward(
        gpcm_betas, coral_taus, packed_params, batch_tile=128)
    coupled = jax.block_until_ready(coupled)
    weights = jax.block_until_ready(info["coupling_weights"])

    ref_coupled, ref_weights = _reference_forward(gpcm_betas, coral_taus, raw_params)
    assert coupled.shape == (B, T) and weights.shape == (B, T)
    assert jnp.allclose(coupled, ref_coupled, atol=1e-4, rtol=1e-4), "coupled mismatch"
    assert jnp.allclose(weights, ref_weights, atol=1e-4, rtol=1e-4), "weights mismatch"

    # bf16 streamed I/O path (halves HBM bytes; math stays f32 inside the kernel).
    betas_bf = gpcm_betas.astype(jnp.bfloat16)
    taus_bf = coral_taus.astype(jnp.bfloat16)
    coupled_bf, _ = dynamic_coupling_forward(betas_bf, taus_bf, packed_params)
    coupled_bf = jax.block_until_ready(coupled_bf)
    ref_c_bf, _ = _reference_forward(
        betas_bf.astype(jnp.float32), taus_bf.astype(jnp.float32), raw_params)
    assert jnp.allclose(coupled_bf.astype(jnp.float32), ref_c_bf,
                        atol=2e-2, rtol=2e-2), "bf16 coupled mismatch"

    print("KERNEL_OK")
</pallas_src>

<mosaic_0001>
module attributes {stable_mosaic.version = 11 : i64} {
  func.func @_dynamic_coupling_kernel(%arg0: i32, %arg1: memref<8x128xf32, #tpu.memory_space<vmem>>, %arg2: memref<8x128xf32, #tpu.memory_space<vmem>>, %arg3: memref<1x128xf32, #tpu.memory_space<vmem>>, %arg4: memref<1x128xf32, #tpu.memory_space<vmem>>, %arg5: memref<1x128xf32, #tpu.memory_space<vmem>>, %arg6: memref<128x384xf32, #tpu.memory_space<vmem>>, %arg7: memref<128x384xf32, #tpu.memory_space<vmem>>, %arg8: memref<1x384xf32, #tpu.memory_space<vmem>>, %arg9: memref<256x128xf32, #tpu.memory_space<vmem>>, %arg10: memref<1x128xf32, #tpu.memory_space<vmem>>, %arg11: memref<8x128xf32, #tpu.memory_space<vmem>>, %arg12: memref<8x128xf32, #tpu.memory_space<vmem>>) attributes {dimension_semantics = [#tpu.dimension_semantics<parallel>], iteration_bounds = array<i64: 2>, scalar_prefetch = 0 : i64, scratch_operands = 0 : i64, tpu.core_type = #tpu.core_type<tc>, window_params = [{transform_indices = @transform_0, window_bounds = array<i64: 8, 128>}, {transform_indices = @transform_1, window_bounds = array<i64: 8, 128>}, {pipeline_mode = #tpu.pipeline_mode<synchronous>, transform_indices = @transform_2, window_bounds = array<i64: 1, 128>}, {pipeline_mode = #tpu.pipeline_mode<synchronous>, transform_indices = @transform_3, window_bounds = array<i64: 1, 128>}, {pipeline_mode = #tpu.pipeline_mode<synchronous>, transform_indices = @transform_4, window_bounds = array<i64: 1, 128>}, {pipeline_mode = #tpu.pipeline_mode<synchronous>, transform_indices = @transform_5, window_bounds = array<i64: 128, 384>}, {pipeline_mode = #tpu.pipeline_mode<synchronous>, transform_indices = @transform_6, window_bounds = array<i64: 128, 384>}, {pipeline_mode = #tpu.pipeline_mode<synchronous>, transform_indices = @transform_7, window_bounds = array<i64: 1, 384>}, {pipeline_mode = #tpu.pipeline_mode<synchronous>, transform_indices = @transform_8, window_bounds = array<i64: 256, 128>}, {pipeline_mode = #tpu.pipeline_mode<synchronous>, transform_indices = @transform_9, window_bounds = array<i64: 1, 128>}, {transform_indices = @transform_10, window_bounds = array<i64: 8, 128>}, {transform_indices = @transform_11, window_bounds = array<i64: 8, 128>}]} {
    %c0 = arith.constant 0 : index
    %c0_0 = arith.constant 0 : index
    %0 = vector.load %arg1[%c0, %c0_0] : memref<8x128xf32, #tpu.memory_space<vmem>>, vector<8x128xf32>
    %c0_1 = arith.constant 0 : index
    %c0_2 = arith.constant 0 : index
    %1 = vector.load %arg2[%c0_1, %c0_2] : memref<8x128xf32, #tpu.memory_space<vmem>>, vector<8x128xf32>
    %c0_3 = arith.constant 0 : index
    %c0_4 = arith.constant 0 : index
    %2 = vector.load %arg6[%c0_3, %c0_4] : memref<128x384xf32, #tpu.memory_space<vmem>>, vector<128x384xf32>
    %cst = arith.constant dense<0.000000e+00> : vector<8x384xf32>
    %3 = tpu.matmul %0, %2, %cst {dimension_numbers = #tpu.dot_dimension_numbers<[1], [0], [0], [1], [0, 0, 1, 1], [], []>} : vector<8x128xf32>, vector<128x384xf32>, vector<8x384xf32> -> vector<8x384xf32>
    %c0_5 = arith.constant 0 : index
    %c0_6 = arith.constant 0 : index
    %4 = vector.load %arg7[%c0_5, %c0_6] : memref<128x384xf32, #tpu.memory_space<vmem>>, vector<128x384xf32>
    %cst_7 = arith.constant dense<0.000000e+00> : vector<8x384xf32>
    %5 = tpu.matmul %1, %4, %cst_7 {dimension_numbers = #tpu.dot_dimension_numbers<[1], [0], [0], [1], [0, 0, 1, 1], [], []>} : vector<8x128xf32>, vector<128x384xf32>, vector<8x384xf32> -> vector<8x384xf32>
    %6 = arith.addf %3, %5 : vector<8x384xf32>
    %c0_8 = arith.constant 0 : index
    %c0_9 = arith.constant 0 : index
    %7 = vector.load %arg8[%c0_8, %c0_9] : memref<1x384xf32, #tpu.memory_space<vmem>>, vector<1x384xf32>
    %8 = vector.broadcast %7 : vector<1x384xf32> to vector<8x384xf32>
    %9 = arith.addf %6, %8 : vector<8x384xf32>
    %10 = vector.extract_strided_slice %9 {offsets = [0, 0], sizes = [8, 256], strides = [1, 1]} : vector<8x384xf32> to vector<8x256xf32>
    %11 = vector.extract_strided_slice %9 {offsets = [0, 256], sizes = [8, 128], strides = [1, 1]} : vector<8x384xf32> to vector<8x128xf32>
    %12 = arith.negf %11 : vector<8x128xf32>
    %13 = math.exp %12 : vector<8x128xf32>
    %cst_10 = arith.constant 1.000000e+00 : f32
    %14 = vector.broadcast %cst_10 : f32 to vector<8x128xf32>
    %15 = arith.addf %14, %13 : vector<8x128xf32>
    %16 = arith.divf %14, %15 : vector<8x128xf32>
    %c0_11 = arith.constant 0 : index
    %c0_12 = arith.constant 0 : index
    %17 = vector.load %arg3[%c0_11, %c0_12] : memref<1x128xf32, #tpu.memory_space<vmem>>, vector<1x128xf32>
    %18 = vector.broadcast %17 : vector<1x128xf32> to vector<8x128xf32>
    %19 = arith.mulf %18, %0 : vector<8x128xf32>
    %c0_13 = arith.constant 0 : index
    %c0_14 = arith.constant 0 : index
    %20 = vector.load %arg4[%c0_13, %c0_14] : memref<1x128xf32, #tpu.memory_space<vmem>>, vector<1x128xf32>
    %21 = vector.broadcast %20 : vector<1x128xf32> to vector<8x128xf32>
    %22 = arith.mulf %21, %1 : vector<8x128xf32>
    %23 = arith.addf %19, %22 : vector<8x128xf32>
    %c0_15 = arith.constant 0 : index
    %c0_16 = arith.constant 0 : index
    %24 = vector.load %arg5[%c0_15, %c0_16] : memref<1x128xf32, #tpu.memory_space<vmem>>, vector<1x128xf32>
    %25 = vector.broadcast %24 : vector<1x128xf32> to vector<8x128xf32>
    %26 = arith.addf %23, %25 : vector<8x128xf32>
    %cst_17 = arith.constant 0.000000e+00 : f32
    %27 = vector.broadcast %cst_17 : f32 to vector<8x256xf32>
    %28 = arith.maximumf %10, %27 : vector<8x256xf32>
    %c0_18 = arith.constant 0 : index
    %c0_19 = arith.constant 0 : index
    %29 = vector.load %arg9[%c0_18, %c0_19] : memref<256x128xf32, #tpu.memory_space<vmem>>, vector<256x128xf32>
    %cst_20 = arith.constant dense<0.000000e+00> : vector<8x128xf32>
    %30 = tpu.matmul %28, %29, %cst_20 {dimension_numbers = #tpu.dot_dimension_numbers<[1], [0], [0], [1], [0, 0, 1, 1], [], []>} : vector<8x256xf32>, vector<256x128xf32>, vector<8x128xf32> -> vector<8x128xf32>
    %c0_21 = arith.constant 0 : index
    %c0_22 = arith.constant 0 : index
    %31 = vector.load %arg10[%c0_21, %c0_22] : memref<1x128xf32, #tpu.memory_space<vmem>>, vector<1x128xf32>
    %32 = vector.broadcast %31 : vector<1x128xf32> to vector<8x128xf32>
    %33 = arith.addf %30, %32 : vector<8x128xf32>
    %34 = math.tanh %33 : vector<8x128xf32>
    %35 = arith.subf %26, %34 : vector<8x128xf32>
    %36 = arith.mulf %16, %35 : vector<8x128xf32>
    %37 = arith.addf %34, %36 : vector<8x128xf32>
    %c0_23 = arith.constant 0 : index
    %c0_24 = arith.constant 0 : index
    %38 = vector.load %arg11[%c0_23, %c0_24] : memref<8x128xf32, #tpu.memory_space<vmem>>, vector<8x128xf32>
    tpu.vector_store %arg11[%c0_23, %c0_24], %37 {strides = array<i32>} : memref<8x128xf32, #tpu.memory_space<vmem>>, vector<8x128xf32>,
    %c0_25 = arith.constant 0 : index
    %c0_26 = arith.constant 0 : index
    %39 = vector.load %arg12[%c0_25, %c0_26] : memref<8x128xf32, #tpu.memory_space<vmem>>, vector<8x128xf32>
    tpu.vector_store %arg12[%c0_25, %c0_26], %16 {strides = array<i32>} : memref<8x128xf32, #tpu.memory_space<vmem>>, vector<8x128xf32>,
    return
  }
  func.func @transform_0(%arg0: i32) -> (i32, i32) {
    %c0_i32 = arith.constant 0 : i32
    %c0_i32_0 = arith.constant 0 : i32
    return %arg0, %c0_i32 : i32, i32
  }
  func.func @transform_1(%arg0: i32) -> (i32, i32) {
    %c0_i32 = arith.constant 0 : i32
    %c0_i32_0 = arith.constant 0 : i32
    return %arg0, %c0_i32 : i32, i32
  }
  func.func @transform_2(%arg0: i32) -> (i32, i32) {
    %c0_i32 = arith.constant 0 : i32
    %c0_i32_0 = arith.constant 0 : i32
    %c0_i32_1 = arith.constant 0 : i32
    return %c0_i32, %c0_i32_0 : i32, i32
  }
  func.func @transform_3(%arg0: i32) -> (i32, i32) {
    %c0_i32 = arith.constant 0 : i32
    %c0_i32_0 = arith.constant 0 : i32
    %c0_i32_1 = arith.constant 0 : i32
    return %c0_i32, %c0_i32_0 : i32, i32
  }
  func.func @transform_4(%arg0: i32) -> (i32, i32) {
    %c0_i32 = arith.constant 0 : i32
    %c0_i32_0 = arith.constant 0 : i32
    %c0_i32_1 = arith.constant 0 : i32
    return %c0_i32, %c0_i32_0 : i32, i32
  }
  func.func @transform_5(%arg0: i32) -> (i32, i32) {
    %c0_i32 = arith.constant 0 : i32
    %c0_i32_0 = arith.constant 0 : i32
    %c0_i32_1 = arith.constant 0 : i32
    return %c0_i32, %c0_i32_0 : i32, i32
  }
  func.func @transform_6(%arg0: i32) -> (i32, i32) {
    %c0_i32 = arith.constant 0 : i32
    %c0_i32_0 = arith.constant 0 : i32
    %c0_i32_1 = arith.constant 0 : i32
    return %c0_i32, %c0_i32_0 : i32, i32
  }
  func.func @transform_7(%arg0: i32) -> (i32, i32) {
    %c0_i32 = arith.constant 0 : i32
    %c0_i32_0 = arith.constant 0 : i32
    %c0_i32_1 = arith.constant 0 : i32
    return %c0_i32, %c0_i32_0 : i32, i32
  }
  func.func @transform_8(%arg0: i32) -> (i32, i32) {
    %c0_i32 = arith.constant 0 : i32
    %c0_i32_0 = arith.constant 0 : i32
    %c0_i32_1 = arith.constant 0 : i32
    return %c0_i32, %c0_i32_0 : i32, i32
  }
  func.func @transform_9(%arg0: i32) -> (i32, i32) {
    %c0_i32 = arith.constant 0 : i32
    %c0_i32_0 = arith.constant 0 : i32
    %c0_i32_1 = arith.constant 0 : i32
    return %c0_i32, %c0_i32_0 : i32, i32
  }
  func.func @transform_10(%arg0: i32) -> (i32, i32) {
    %c0_i32 = arith.constant 0 : i32
    %c0_i32_0 = arith.constant 0 : i32
    return %arg0, %c0_i32 : i32, i32
  }
  func.func @transform_11(%arg0: i32) -> (i32, i32) {
    %c0_i32 = arith.constant 0 : i32
    %c0_i32_0 = arith.constant 0 : i32
    return %arg0, %c0_i32 : i32, i32
  }
}

</mosaic_0001>

<llo_original>
// kernel: tpu_custom_call.1
$region0: #{tpu_custom_call.1}
  #allocation0 [shape = 'u32[]', space=smem, size = 0x4, offset = 0x4, fixed_abs, tag = 'smem constant byte address 0x4 - core index']
  #allocation1 [shape = 'u32[144,128]{1,0:T(1,128)}', space=vmem, size = 0x12000, scoped, tag = 'internal scratch']
  %s0 = inlined_call_operand.hbm [shape: f32[16,128], index: 0, kind: input, shape index: {}]
  %s1 = inlined_call_operand.hbm [shape: f32[16,128], index: 1, kind: input, shape index: {}]
  %s2 = inlined_call_operand.vmem [shape: f32[1,128], index: 2, kind: input, shape index: {}]
  %s3 = inlined_call_operand.vmem [shape: f32[1,128], index: 3, kind: input, shape index: {}]
  %s4 = inlined_call_operand.vmem [shape: f32[1,128], index: 4, kind: input, shape index: {}]
  %s5 = inlined_call_operand.hbm [shape: f32[128,384], index: 5, kind: input, shape index: {}]
  %s6 = inlined_call_operand.hbm [shape: f32[128,384], index: 6, kind: input, shape index: {}]
  %s7 = inlined_call_operand.vmem [shape: f32[1,384], index: 7, kind: input, shape index: {}]
  %s8 = inlined_call_operand.hbm [shape: f32[256,128], index: 8, kind: input, shape index: {}]
  %s9 = inlined_call_operand.vmem [shape: f32[1,128], index: 9, kind: input, shape index: {}]
  %s10 = inlined_call_operand.hbm [shape: f32[16,128], index: 10, kind: output, shape index: {0}]
  %s11 = inlined_call_operand.hbm [shape: f32[16,128], index: 11, kind: output, shape index: {1}]
  %12 = xla_tuple %s10, %s11
  %s13 = sld [smem:[#allocation0]]
  $region101: #{tpu_custom_call.1} parent=0
    _
  %s15 = ssub.s32 1, %s13
  %s16 = scalar_select 0, %s15, %s13
  $region1: #{tpu_custom_call.1} parent=0
    #allocation2 [shape = 'u8[8192]{0}', space=vmem, size = 0x2000, scoped, tag = 'input window, operand 0']
    #allocation3 [shape = 's32[2]{0}', space=sflag, size = 0x8, scoped, tag = 'scoped memory for tpu_custom_call.1']
    #allocation4 [shape = 's32[2]{0}', space=sflag, size = 0x8, scoped, tag = 'scoped memory for tpu_custom_call.1']
    #allocation5 [shape = 'u8[8192]{0}', space=vmem, size = 0x2000, scoped, tag = 'input window, operand 1']
    #allocation6 [shape = 's32[2]{0}', space=sflag, size = 0x8, scoped, tag = 'scoped memory for tpu_custom_call.1']
    #allocation7 [shape = 'u8[196608]{0}', space=vmem, size = 0x30000, scoped, tag = 'input window, operand 5, single buffered']
    #allocation8 [shape = 'u8[196608]{0}', space=vmem, size = 0x30000, scoped, tag = 'input window, operand 6, single buffered']
    #allocation9 [shape = 's32[1]{0}', space=sflag, size = 0x4, scoped, tag = 'scoped memory for tpu_custom_call.1']
    #allocation10 [shape = 'u8[131072]{0}', space=vmem, size = 0x20000, scoped, tag = 'input window, operand 8, single buffered']
    #allocation11 [shape = 'u8[8192]{0}', space=vmem, size = 0x2000, scoped, tag = 'output window, operand 0']
    #allocation12 [shape = 'u8[8192]{0}', space=vmem, size = 0x2000, scoped, tag = 'output window, operand 1']
    #allocation13 [shape = 's32[2]{0}', space=sflag, size = 0x8, scoped, tag = 'scoped memory for tpu_custom_call.1']
    %17 = vsyncpa [#allocation3], 0
    %s18 = scalar_lea.sflag [#allocation3], 1
    %19 = vsyncpa %s18, 0
    %20 = vsyncpa [#allocation6], 0
    %s21 = scalar_lea.sflag [#allocation6], 1
    %22 = vsyncpa %s21, 0
    %23 = vsyncpa [#allocation9], 0
    %24 = vsyncpa [#allocation4], 0
    %s25 = scalar_lea.sflag [#allocation4], 1
    %26 = vsyncpa %s25, 0
    %27 = vsyncpa [#allocation13], 0
    %s28 = scalar_lea.sflag [#allocation13], 1
    %29 = vsyncpa %s28, 0
    loop: start=0, step=1, limit=4
    $region2: #{tpu_custom_call.1} parent=1 // loop_pre_header
      _
    $region3: #{tpu_custom_call.1} parent=1 // loop_header
      %s31 = sphi 0, %s35
      %p32 = scmp.ge.s32.totalorder %s31, 4
      %s41 = sphi 0, %s43
      %s44 = sphi 0, %s41
      %s45 = sphi 0, %s44
      %s61 = sphi 0, %s45
      %s67 = sphi 0, %s69
      %s70 = sphi 0, %s67
      %s71 = sphi 0, %s70
      %s87 = sphi 0, %s71
      %s91 = sphi 0, %s91
      %s93 = sphi 0, %s91
      %s94 = sphi 0, %s93
      %s108 = sphi 0, %s94
      %s112 = sphi 0, %s112
      %s114 = sphi 0, %s112
      %s115 = sphi 0, %s114
      %s129 = sphi 0, %s115
      %s133 = sphi 0, %s133
      %s135 = sphi 0, %s133
      %s136 = sphi 0, %s135
      %s150 = sphi 0, %s136
      %s154 = sphi 0, %s154
      %s156 = sphi 0, %s154
      %s157 = sphi 0, %s156
      %s171 = sphi 0, %s157
      %s175 = sphi 0, %s175
      %s177 = sphi 0, %s175
      %s178 = sphi 0, %s177
      %s192 = sphi 0, %s178
      %s196 = sphi 0, %s196
      %s198 = sphi 0, %s196
      %s199 = sphi 0, %s198
      %s213 = sphi 0, %s199
      %s217 = sphi 0, %s217
      %s219 = sphi 0, %s217
      %s220 = sphi 0, %s219
      %s234 = sphi 0, %s220
      %s238 = sphi 0, %s238
      %s240 = sphi 0, %s238
      %s241 = sphi 0, %s240
      %s255 = sphi 0, %s241
      %s261 = sphi 0, %s263
      %s264 = sphi 0, %s261
      %s265 = sphi 0, %s264
      %s281 = sphi 0, %s265
      %s287 = sphi 0, %s289
      %s290 = sphi 0, %s287
      %s291 = sphi 0, %s290
      %s307 = sphi 0, %s291
    $region4: #{tpu_custom_call.1} parent=1 // loop_header_branch
      %34 = sbr.rel (%p32) target = $region8
    $region5: #{tpu_custom_call.1} parent=1 // loop_body
      %s36 = ssub.s32 %s31, 1
      %s37 = ssub.s32 %s31, 2
      %s38 = sadd.s32 %s31, 1
      %s39 = ssub.s32 %s31, %s38
      %p40 = scmp.eq.s32.totalorder %s39, 0
      %s42 = sadd.s32 %s41, 1
      %s43 = scalar_select %p40, %s41, %s42
      %p46 = pneg %p40
      %p47 = scmp.eq.s32.totalorder %s31, 1
      %p48 = por %p46, %p47
      %p49 = scmp.ne.s32.totalorder %s41, %s44
      %p50 = scmp.eq.s32.totalorder %s31, 0
      %p51 = por %p49, %p50
      %p52 = scmp.ne.s32.totalorder %s41, %s44
      %p53 = scmp.eq.s32.totalorder %s36, 1
      %p54 = por %p52, %p53
      %p55 = scmp.ne.s32.totalorder %s44, %s45
      %p56 = scmp.eq.s32.totalorder %s36, 0
      %p57 = por %p55, %p56
      %p58 = scmp.ne.s32.totalorder %s44, %s45
      %p59 = scmp.eq.s32.totalorder %s37, 1
      %p60 = por %p58, %p59
      %p62 = scmp.ne.s32.totalorder %s45, %s61
      %p63 = scmp.eq.s32.totalorder %s37, 0
      %p64 = por %p62, %p63
      %s65 = ssub.s32 %s31, %s38
      %p66 = scmp.eq.s32.totalorder %s65, 0
      %s68 = sadd.s32 %s67, 1
      %s69 = scalar_select %p66, %s67, %s68
      %p72 = pneg %p66
      %p73 = scmp.eq.s32.totalorder %s31, 1
      %p74 = por %p72, %p73
      %p75 = scmp.ne.s32.totalorder %s67, %s70
      %p76 = scmp.eq.s32.totalorder %s31, 0
      %p77 = por %p75, %p76
      %p78 = scmp.ne.s32.totalorder %s67, %s70
      %p79 = scmp.eq.s32.totalorder %s36, 1
      %p80 = por %p78, %p79
      %p81 = scmp.ne.s32.totalorder %s70, %s71
      %p82 = scmp.eq.s32.totalorder %s36, 0
      %p83 = por %p81, %p82
      %p84 = scmp.ne.s32.totalorder %s70, %s71
      %p85 = scmp.eq.s32.totalorder %s37, 1
      %p86 = por %p84, %p85
      %p88 = scmp.ne.s32.totalorder %s71, %s87
      %p89 = scmp.eq.s32.totalorder %s37, 0
      %p90 = por %p88, %p89
      %s92 = sadd.s32 %s91, 1
      %p95 = scmp.eq.s32.totalorder %s31, 1
      %p96 = scmp.ne.s32.totalorder %s91, %s93
      %p97 = scmp.eq.s32.totalorder %s31, 0
      %p98 = por %p96, %p97
      %p99 = scmp.ne.s32.totalorder %s91, %s93
      %p100 = scmp.eq.s32.totalorder %s36, 1
      %p101 = por %p99, %p100
      %p102 = scmp.ne.s32.totalorder %s93, %s94
      %p103 = scmp.eq.s32.totalorder %s36, 0
      %p104 = por %p102, %p103
      %p105 = scmp.ne.s32.totalorder %s93, %s94
      %p106 = scmp.eq.s32.totalorder %s37, 1
      %p107 = por %p105, %p106
      %p109 = scmp.ne.s32.totalorder %s94, %s108
      %p110 = scmp.eq.s32.totalorder %s37, 0
      %p111 = por %p109, %p110
      %s113 = sadd.s32 %s112, 1
      %p116 = scmp.eq.s32.totalorder %s31, 1
      %p117 = scmp.ne.s32.totalorder %s112, %s114
      %p118 = scmp.eq.s32.totalorder %s31, 0
      %p119 = por %p117, %p118
      %p120 = scmp.ne.s32.totalorder %s112, %s114
      %p121 = scmp.eq.s32.totalorder %s36, 1
      %p122 = por %p120, %p121
      %p123 = scmp.ne.s32.totalorder %s114, %s115
      %p124 = scmp.eq.s32.totalorder %s36, 0
      %p125 = por %p123, %p124
      %p126 = scmp.ne.s32.totalorder %s114, %s115
      %p127 = scmp.eq.s32.totalorder %s37, 1
      %p128 = por %p126, %p127
      %p130 = scmp.ne.s32.totalorder %s115, %s129
      %p131 = scmp.eq.s32.totalorder %s37, 0
      %p132 = por %p130, %p131
      %s134 = sadd.s32 %s133, 1
      %p137 = scmp.eq.s32.totalorder %s31, 1
      %p138 = scmp.ne.s32.totalorder %s133, %s135
      %p139 = scmp.eq.s32.totalorder %s31, 0
      %p140 = por %p138, %p139
      %p141 = scmp.ne.s32.totalorder %s133, %s135
      %p142 = scmp.eq.s32.totalorder %s36, 1
      %p143 = por %p141, %p142
      %p144 = scmp.ne.s32.totalorder %s135, %s136
      %p145 = scmp.eq.s32.totalorder %s36, 0
      %p146 = por %p144, %p145
      %p147 = scmp.ne.s32.totalorder %s135, %s136
      %p148 = scmp.eq.s32.totalorder %s37, 1
      %p149 = por %p147, %p148
      %p151 = scmp.ne.s32.totalorder %s136, %s150
      %p152 = scmp.eq.s32.totalorder %s37, 0
      %p153 = por %p151, %p152
      %s155 = sadd.s32 %s154, 1
      %p158 = scmp.eq.s32.totalorder %s31, 1
      %p159 = scmp.ne.s32.totalorder %s154, %s156
      %p160 = scmp.eq.s32.totalorder %s31, 0
      %p161 = por %p159, %p160
      %p162 = scmp.ne.s32.totalorder %s154, %s156
      %p163 = scmp.eq.s32.totalorder %s36, 1
      %p164 = por %p162, %p163
      %p165 = scmp.ne.s32.totalorder %s156, %s157
      %p166 = scmp.eq.s32.totalorder %s36, 0
      %p167 = por %p165, %p166
      %p168 = scmp.ne.s32.totalorder %s156, %s157
      %p169 = scmp.eq.s32.totalorder %s37, 1
      %p170 = por %p168, %p169
      %p172 = scmp.ne.s32.totalorder %s157, %s171
      %p173 = scmp.eq.s32.totalorder %s37, 0
      %p174 = por %p172, %p173
      %s176 = sadd.s32 %s175, 1
      %p179 = scmp.eq.s32.totalorder %s31, 1
      %p180 = scmp.ne.s32.totalorder %s175, %s177
      %p181 = scmp.eq.s32.totalorder %s31, 0
      %p182 = por %p180, %p181
      %p183 = scmp.ne.s32.totalorder %s175, %s177
      %p184 = scmp.eq.s32.totalorder %s36, 1
      %p185 = por %p183, %p184
      %p186 = scmp.ne.s32.totalorder %s177, %s178
      %p187 = scmp.eq.s32.totalorder %s36, 0
      %p188 = por %p186, %p187
      %p189 = scmp.ne.s32.totalorder %s177, %s178
      %p190 = scmp.eq.s32.totalorder %s37, 1
      %p191 = por %p189, %p190
      %p193 = scmp.ne.s32.totalorder %s178, %s192
      %p194 = scmp.eq.s32.totalorder %s37, 0
      %p195 = por %p193, %p194
      %s197 = sadd.s32 %s196, 1
      %p200 = scmp.eq.s32.totalorder %s31, 1
      %p201 = scmp.ne.s32.totalorder %s196, %s198
      %p202 = scmp.eq.s32.totalorder %s31, 0
      %p203 = por %p201, %p202
      %p204 = scmp.ne.s32.totalorder %s196, %s198
      %p205 = scmp.eq.s32.totalorder %s36, 1
      %p206 = por %p204, %p205
      %p207 = scmp.ne.s32.totalorder %s198, %s199
      %p208 = scmp.eq.s32.totalorder %s36, 0
      %p209 = por %p207, %p208
      %p210 = scmp.ne.s32.totalorder %s198, %s199
      %p211 = scmp.eq.s32.totalorder %s37, 1
      %p212 = por %p210, %p211
      %p214 = scmp.ne.s32.totalorder %s199, %s213
      %p215 = scmp.eq.s32.totalorder %s37, 0
      %p216 = por %p214, %p215
      %s218 = sadd.s32 %s217, 1
      %p221 = scmp.eq.s32.totalorder %s31, 1
      %p222 = scmp.ne.s32.totalorder %s217, %s219
      %p223 = scmp.eq.s32.totalorder %s31, 0
      %p224 = por %p222, %p223
      %p225 = scmp.ne.s32.totalorder %s217, %s219
      %p226 = scmp.eq.s32.totalorder %s36, 1
      %p227 = por %p225, %p226
      %p228 = scmp.ne.s32.totalorder %s219, %s220
      %p229 = scmp.eq.s32.totalorder %s36, 0
      %p230 = por %p228, %p229
      %p231 = scmp.ne.s32.totalorder %s219, %s220
      %p232 = scmp.eq.s32.totalorder %s37, 1
      %p233 = por %p231, %p232
      %p235 = scmp.ne.s32.totalorder %s220, %s234
      %p236 = scmp.eq.s32.totalorder %s37, 0
      %p237 = por %p235, %p236
      %s239 = sadd.s32 %s238, 1
      %p242 = scmp.eq.s32.totalorder %s31, 1
      %p243 = scmp.ne.s32.totalorder %s238, %s240
      %p244 = scmp.eq.s32.totalorder %s31, 0
      %p245 = por %p243, %p244
      %p246 = scmp.ne.s32.totalorder %s238, %s240
      %p247 = scmp.eq.s32.totalorder %s36, 1
      %p248 = por %p246, %p247
      %p249 = scmp.ne.s32.totalorder %s240, %s241
      %p250 = scmp.eq.s32.totalorder %s36, 0
      %p251 = por %p249, %p250
      %p252 = scmp.ne.s32.totalorder %s240, %s241
      %p253 = scmp.eq.s32.totalorder %s37, 1
      %p254 = por %p252, %p253
      %p256 = scmp.ne.s32.totalorder %s241, %s255
      %p257 = scmp.eq.s32.totalorder %s37, 0
      %p258 = por %p256, %p257
      %s259 = ssub.s32 %s31, %s38
      %p260 = scmp.eq.s32.totalorder %s259, 0
      %s262 = sadd.s32 %s261, 1
      %s263 = scalar_select %p260, %s261, %s262
      %p266 = pneg %p260
      %p267 = scmp.eq.s32.totalorder %s31, 1
      %p268 = por %p266, %p267
      %p269 = scmp.ne.s32.totalorder %s261, %s264
      %p270 = scmp.eq.s32.totalorder %s31, 0
      %p271 = por %p269, %p270
      %p272 = scmp.ne.s32.totalorder %s261, %s264
      %p273 = scmp.eq.s32.totalorder %s36, 1
      %p274 = por %p272, %p273
      %p275 = scmp.ne.s32.totalorder %s264, %s265
      %p276 = scmp.eq.s32.totalorder %s36, 0
      %p277 = por %p275, %p276
      %p278 = scmp.ne.s32.totalorder %s264, %s265
      %p279 = scmp.eq.s32.totalorder %s37, 1
      %p280 = por %p278, %p279
      %p282 = scmp.ne.s32.totalorder %s265, %s281
      %p283 = scmp.eq.s32.totalorder %s37, 0
      %p284 = por %p282, %p283
      %s285 = ssub.s32 %s31, %s38
      %p286 = scmp.eq.s32.totalorder %s285, 0
      %s288 = sadd.s32 %s287, 1
      %s289 = scalar_select %p286, %s287, %s288
      %p292 = pneg %p286
      %p293 = scmp.eq.s32.totalorder %s31, 1
      %p294 = por %p292, %p293
      %p295 = scmp.ne.s32.totalorder %s287, %s290
      %p296 = scmp.eq.s32.totalorder %s31, 0
      %p297 = por %p295, %p296
      %p298 = scmp.ne.s32.totalorder %s287, %s290
      %p299 = scmp.eq.s32.totalorder %s36, 1
      %p300 = por %p298, %p299
      %p301 = scmp.ne.s32.totalorder %s290, %s291
      %p302 = scmp.eq.s32.totalorder %s36, 0
      %p303 = por %p301, %p302
      %p304 = scmp.ne.s32.totalorder %s290, %s291
      %p305 = scmp.eq.s32.totalorder %s37, 1
      %p306 = por %p304, %p305
      %p308 = scmp.ne.s32.totalorder %s291, %s307
      %p309 = scmp.eq.s32.totalorder %s37, 0
      %p310 = por %p308, %p309
      %p311 = scmp.le.s32.totalorder 1, %s31
      %p312 = scmp.lt.s32.totalorder %s31, 3
      %p313 = pnand %p311, %p312
      %p314 = pneg %p313
      // Predicated region
      $region9: #{tpu_custom_call.1} parent=5 // pred_check
        _
      $region10: #{tpu_custom_call.1} parent=5 // pred_check_branch
        %316 = sbr.rel (%p313) target = $region12
      $region11: #{tpu_custom_call.1} parent=5 // pred_region
        %s317 = ssub.s32 %s31, 1
        // Predicated region
        $region13: #{tpu_custom_call.1} parent=11 // pred_check
          %p318 = pneg %p104
        $region14: #{tpu_custom_call.1} parent=11 // pred_check_branch
          %320 = sbr.rel (%p318) target = $region16
        $region15: #{tpu_custom_call.1} parent=11 // pred_region
          _
        $region16: #{tpu_custom_call.1} parent=11 // pred_fallthru
          _
        // Predicated region
        $region17: #{tpu_custom_call.1} parent=11 // pred_check
          %p321 = pneg %p125
        $region18: #{tpu_custom_call.1} parent=11 // pred_check_branch
          %323 = sbr.rel (%p321) target = $region20
        $region19: #{tpu_custom_call.1} parent=11 // pred_region
          _
        $region20: #{tpu_custom_call.1} parent=11 // pred_fallthru
          _
        // Predicated region
        $region21: #{tpu_custom_call.1} parent=11 // pred_check
          %p324 = pneg %p146
        $region22: #{tpu_custom_call.1} parent=11 // pred_check_branch
          %326 = sbr.rel (%p324) target = $region24
        $region23: #{tpu_custom_call.1} parent=11 // pred_region
          _
        $region24: #{tpu_custom_call.1} parent=11 // pred_fallthru
          _
        // Predicated region
        $region25: #{tpu_custom_call.1} parent=11 // pred_check
          %p327 = pneg %p167
        $region26: #{tpu_custom_call.1} parent=11 // pred_check_branch
          %329 = sbr.rel (%p327) target = $region28
        $region27: #{tpu_custom_call.1} parent=11 // pred_region
          %s331 = ssub.s32 6144, 6144
          %332 = vsyncadd [#allocation6], %s331
          %s333 = sshll.u32 [#allocation7], 4
          %s334 = int_to_ptr.vmem [resolvable:$true] %s333
          %339 = dma.hbm_to_vmem [thread:$0]  %s5, 6144, %s334, [#allocation6], 384, 384, 24
        $region28: #{tpu_custom_call.1} parent=11 // pred_fallthru
          _
        // Predicated region
        $region29: #{tpu_custom_call.1} parent=11 // pred_check
          %p340 = pneg %p188
        $region30: #{tpu_custom_call.1} parent=11 // pred_check_branch
          %342 = sbr.rel (%p340) target = $region32
        $region31: #{tpu_custom_call.1} parent=11 // pred_region
          %s344 = ssub.s32 6144, 6144
          %345 = vsyncadd [#allocation9], %s344
          %s346 = sshll.u32 [#allocation8], 4
          %s347 = int_to_ptr.vmem [resolvable:$true] %s346
          %352 = dma.hbm_to_vmem [thread:$0]  %s6, 6144, %s347, [#allocation9], 384, 384, 24
        $region32: #{tpu_custom_call.1} parent=11 // pred_fallthru
          _
        // Predicated region
        $region33: #{tpu_custom_call.1} parent=11 // pred_check
          %p353 = pneg %p209
        $region34: #{tpu_custom_call.1} parent=11 // pred_check_branch
          %355 = sbr.rel (%p353) target = $region36
        $region35: #{tpu_custom_call.1} parent=11 // pred_region
          _
        $region36: #{tpu_custom_call.1} parent=11 // pred_fallthru
          _
        // Predicated region
        $region37: #{tpu_custom_call.1} parent=11 // pred_check
          %p356 = pneg %p230
        $region38: #{tpu_custom_call.1} parent=11 // pred_check_branch
          %358 = sbr.rel (%p356) target = $region40
        $region39: #{tpu_custom_call.1} parent=11 // pred_region
          %s360 = ssub.s32 4096, 4096
          %361 = vsyncadd [#allocation9], %s360
          %s362 = sshll.u32 [#allocation10], 4
          %s363 = int_to_ptr.vmem [resolvable:$true] %s362
          %368 = dma.hbm_to_vmem [thread:$0]  %s8, 4096, %s363, [#allocation9], 128, 128, 8
        $region40: #{tpu_custom_call.1} parent=11 // pred_fallthru
          _
        // Predicated region
        $region41: #{tpu_custom_call.1} parent=11 // pred_check
          %p369 = pneg %p251
        $region42: #{tpu_custom_call.1} parent=11 // pred_check_branch
          %371 = sbr.rel (%p369) target = $region44
        $region43: #{tpu_custom_call.1} parent=11 // pred_region
          _
        $region44: #{tpu_custom_call.1} parent=11 // pred_fallthru
          _
      $region12: #{tpu_custom_call.1} parent=5 // pred_fallthru
        _
      %p372 = scmp.lt.s32.totalorder %s31, 2
      // Predicated region
      $region45: #{tpu_custom_call.1} parent=5 // pred_check
        %p373 = pneg %p372
      $region46: #{tpu_custom_call.1} parent=5 // pred_check_branch
        %375 = sbr.rel (%p373) target = $region48
      $region47: #{tpu_custom_call.1} parent=5 // pred_region
        // Predicated region
        $region49: #{tpu_custom_call.1} parent=47 // pred_check
          %p376 = pneg %p51
        $region50: #{tpu_custom_call.1} parent=47 // pred_check_branch
          %378 = sbr.rel (%p376) target = $region52
        $region51: #{tpu_custom_call.1} parent=47 // pred_region
          %s379 = sand.u32 %s41, 1
          %s380 = scalar_lea.sflag [#allocation3], %s379
          %s381 = sand.u32 %s41, 1
          %s382 = smul.addr %s381, 8
          %s383 = scalar_lea.vmem [#allocation2], %s382
          %s385 = ssub.s32 128, 128
          %386 = vsyncadd %s380, %s385
          %s387 = smul.addr %s31, 128
          %s388 = scalar_lea.hbm %s0, %s387
          %s390 = sshll.u32 %s383, 4
          %s391 = int_to_ptr.vmem [resolvable:$true] %s390
          %393 = dma.hbm_to_vmem [thread:$0]  %s388, 128, %s391, %s380
        $region52: #{tpu_custom_call.1} parent=47 // pred_fallthru
          _
        // Predicated region
        $region53: #{tpu_custom_call.1} parent=47 // pred_check
          %p394 = pneg %p77
        $region54: #{tpu_custom_call.1} parent=47 // pred_check_branch
          %396 = sbr.rel (%p394) target = $region56
        $region55: #{tpu_custom_call.1} parent=47 // pred_region
          %s397 = sand.u32 %s31, 1
          %s398 = scalar_lea.sflag [#allocation6], %s397
          %s399 = sand.u32 %s67, 1
          %s400 = smul.addr %s399, 8
          %s401 = scalar_lea.vmem [#allocation5], %s400
          %s403 = ssub.s32 128, 128
          %404 = vsyncadd %s398, %s403
          %s405 = smul.addr %s31, 128
          %s406 = scalar_lea.hbm %s1, %s405
          %s408 = sshll.u32 %s401, 4
          %s409 = int_to_ptr.vmem [resolvable:$true] %s408
          %411 = dma.hbm_to_vmem [thread:$0]  %s406, 128, %s409, %s398
        $region56: #{tpu_custom_call.1} parent=47 // pred_fallthru
          _
      $region48: #{tpu_custom_call.1} parent=5 // pred_fallthru
        _
      %p412 = scmp.le.s32.totalorder 1, %s31
      %p413 = scmp.lt.s32.totalorder %s31, 3
      %p414 = pnand %p412, %p413
      %p415 = pneg %p414
      // Predicated region
      $region57: #{tpu_custom_call.1} parent=5 // pred_check
        _
      $region58: #{tpu_custom_call.1} parent=5 // pred_check_branch
        %417 = sbr.rel (%p414) target = $region60
      $region59: #{tpu_custom_call.1} parent=5 // pred_region
        %s418 = ssub.s32 %s31, 1
        %s419 = sand.u32 %s44, 1
        %s420 = scalar_lea.sflag [#allocation3], %s419
        %s421 = sand.u32 %s44, 1
        %s422 = smul.addr %s421, 8
        %s423 = scalar_lea.vmem [#allocation2], %s422
        // Predicated region
        $region61: #{tpu_custom_call.1} parent=59 // pred_check
          %p424 = pneg %p57
        $region62: #{tpu_custom_call.1} parent=59 // pred_check_branch
          %426 = sbr.rel (%p424) target = $region64
        $region63: #{tpu_custom_call.1} parent=59 // pred_region
          %427 = dma.done %s420, 128
        $region64: #{tpu_custom_call.1} parent=59 // pred_fallthru
          _
        %s428 = sand.u32 %s36, 1
        %s429 = scalar_lea.sflag [#allocation6], %s428
        %s430 = sand.u32 %s70, 1
        %s431 = smul.addr %s430, 8
        %s432 = scalar_lea.vmem [#allocation5], %s431
        // Predicated region
        $region65: #{tpu_custom_call.1} parent=59 // pred_check
          %p433 = pneg %p83
        $region66: #{tpu_custom_call.1} parent=59 // pred_check_branch
          %435 = sbr.rel (%p433) target = $region68
        $region67: #{tpu_custom_call.1} parent=59 // pred_region
          %436 = dma.done %s429, 128
        $region68: #{tpu_custom_call.1} parent=59 // pred_fallthru
          _
        // Predicated region
        $region69: #{tpu_custom_call.1} parent=59 // pred_check
          %p437 = pneg %p167
        $region70: #{tpu_custom_call.1} parent=59 // pred_check_branch
          %439 = sbr.rel (%p437) target = $region72
        $region71: #{tpu_custom_call.1} parent=59 // pred_region
          %440 = dma.done [#allocation6], 6144
        $region72: #{tpu_custom_call.1} parent=59 // pred_fallthru
          _
        // Predicated region
        $region73: #{tpu_custom_call.1} parent=59 // pred_check
          %p441 = pneg %p188
        $region74: #{tpu_custom_call.1} parent=59 // pred_check_branch
          %443 = sbr.rel (%p441) target = $region76
        $region75: #{tpu_custom_call.1} parent=59 // pred_region
          %444 = dma.done [#allocation9], 6144
        $region76: #{tpu_custom_call.1} parent=59 // pred_fallthru
          _
        // Predicated region
        $region77: #{tpu_custom_call.1} parent=59 // pred_check
          %p445 = pneg %p230
        $region78: #{tpu_custom_call.1} parent=59 // pred_check_branch
          %447 = sbr.rel (%p445) target = $region80
        $region79: #{tpu_custom_call.1} parent=59 // pred_region
          %448 = dma.done [#allocation9], 4096
        $region80: #{tpu_custom_call.1} parent=59 // pred_fallthru
          _
        %s449 = sand.u32 %s44, 1
        %s450 = scalar_lea.sflag [#allocation3], %s449
        %s451 = sand.u32 %s44, 1
        %s452 = smul.addr %s451, 8
        %s453 = scalar_lea.vmem [#allocation2], %s452
        %p454 = pneg %p57
        %p455 = pneg %p54
        %s456 = sand.u32 %s36, 1
        %s457 = scalar_lea.sflag [#allocation6], %s456
        %s458 = sand.u32 %s70, 1
        %s459 = smul.addr %s458, 8
        %s460 = scalar_lea.vmem [#allocation5], %s459
        %p461 = pneg %p83
        %p462 = pneg %p80
        %p463 = pneg %p104
        %p464 = pneg %p101
        %p465 = pneg %p125
        %p466 = pneg %p122
        %p467 = pneg %p146
        %p468 = pneg %p143
        %p469 = pneg %p167
        %p470 = pneg %p164
        %p471 = pneg %p188
        %p472 = pneg %p185
        %p473 = pneg %p209
        %p474 = pneg %p206
        %p475 = pneg %p230
        %p476 = pneg %p227
        %p477 = pneg %p251
        %p478 = pneg %p248
        %p479 = pneg %p277
        %p480 = pneg %p274
        %s481 = sand.u32 %s264, 1
        %s482 = scalar_lea.sflag [#allocation4], %s481
        %s483 = sand.u32 %s264, 1
        %s484 = smul.addr %s483, 8
        %s485 = scalar_lea.vmem [#allocation11], %s484
        %p486 = pneg %p303
        %p487 = pneg %p300
        %s488 = sand.u32 %s290, 1
        %s489 = scalar_lea.sflag [#allocation13], %s488
        %s490 = sand.u32 %s290, 1
        %s491 = smul.addr %s490, 8
        %s492 = scalar_lea.vmem [#allocation12], %s491
        %v493 = vld [vmem:[%s423] sm:$0xff]
        %v494 = vld [vmem:[%s432] sm:$0xff]
        %v495 = vld [vmem:[#allocation7] sm:$0xff]
        %v496 = vld [vmem:[#allocation7 + $0x8] sm:$0xff]
        %v497 = vld [vmem:[#allocation7 + $0x10] sm:$0xff]
        %v498 = vld [vmem:[#allocation7 + $0x18] sm:$0xff]
        %v499 = vld [vmem:[#allocation7 + $0x20] sm:$0xff]
        %v500 = vld [vmem:[#allocation7 + $0x28] sm:$0xff]
        %v501 = vld [vmem:[#allocation7 + $0x30] sm:$0xff]
        %v502 = vld [vmem:[#allocation7 + $0x38] sm:$0xff]
        %v503 = vld [vmem:[#allocation7 + $0x40] sm:$0xff]
        %v504 = vld [vmem:[#allocation7 + $0x48] sm:$0xff]
        %v505 = vld [vmem:[#allocation7 + $0x50] sm:$0xff]
        %v506 = vld [vmem:[#allocation7 + $0x58] sm:$0xff]
        %v507 = vld [vmem:[#allocation7 + $0x60] sm:$0xff]
        %v508 = vld [vmem:[#allocation7 + $0x68] sm:$0xff]
        %v509 = vld [vmem:[#allocation7 + $0x70] sm:$0xff]
        %v510 = vld [vmem:[#allocation7 + $0x78] sm:$0xff]
        %v511 = vld [vmem:[#allocation7 + $0x80] sm:$0xff]
        %v512 = vld [vmem:[#allocation7 + $0x88] sm:$0xff]
        %v513 = vld [vmem:[#allocation7 + $0x90] sm:$0xff]
        %v514 = vld [vmem:[#allocation7 + $0x98] sm:$0xff]
        %v515 = vld [vmem:[#allocation7 + $0xa0] sm:$0xff]
        %v516 = vld [vmem:[#allocation7 + $0xa8] sm:$0xff]
        %v517 = vld [vmem:[#allocation7 + $0xb0] sm:$0xff]
        %v518 = vld [vmem:[#allocation7 + $0xb8] sm:$0xff]
        %v519 = vld [vmem:[#allocation7 + $0xc0] sm:$0xff]
        %v520 = vld [vmem:[#allocation7 + $0xc8] sm:$0xff]
        %v521 = vld [vmem:[#allocation7 + $0xd0] sm:$0xff]
        %v522 = vld [vmem:[#allocation7 + $0xd8] sm:$0xff]
        %v523 = vld [vmem:[#allocation7 + $0xe0] sm:$0xff]
        %v524 = vld [vmem:[#allocation7 + $0xe8] sm:$0xff]
        %v525 = vld [vmem:[#allocation7 + $0xf0] sm:$0xff]
        %v526 = vld [vmem:[#allocation7 + $0xf8] sm:$0xff]
        %v527 = vld [vmem:[#allocation7 + $0x100] sm:$0xff]
        %v528 = vld [vmem:[#allocation7 + $0x108] sm:$0xff]
        %v529 = vld [vmem:[#allocation7 + $0x110] sm:$0xff]
        %v530 = vld [vmem:[#allocation7 + $0x118] sm:$0xff]
        %v531 = vld [vmem:[#allocation7 + $0x120] sm:$0xff]
        %v532 = vld [vmem:[#allocation7 + $0x128] sm:$0xff]
        %v533 = vld [vmem:[#allocation7 + $0x130] sm:$0xff]
        %v534 = vld [vmem:[#allocation7 + $0x138] sm:$0xff]
        %v535 = vld [vmem:[#allocation7 + $0x140] sm:$0xff]
        %v536 = vld [vmem:[#allocation7 + $0x148] sm:$0xff]
        %v537 = vld [vmem:[#allocation7 + $0x150] sm:$0xff]
        %v538 = vld [vmem:[#allocation7 + $0x158] sm:$0xff]
        %v539 = vld [vmem:[#allocation7 + $0x160] sm:$0xff]
        %v540 = vld [vmem:[#allocation7 + $0x168] sm:$0xff]
        %v541 = vld [vmem:[#allocation7 + $0x170] sm:$0xff]
        %v542 = vld [vmem:[#allocation7 + $0x178] sm:$0xff]
        %v543 = vld [vmem:[#allocation8] sm:$0xff]
        %v544 = vld [vmem:[#allocation8 + $0x8] sm:$0xff]
        %v545 = vld [vmem:[#allocation8 + $0x10] sm:$0xff]
        %v546 = vld [vmem:[#allocation8 + $0x18] sm:$0xff]
        %v547 = vld [vmem:[#allocation8 + $0x20] sm:$0xff]
        %v548 = vld [vmem:[#allocation8 + $0x28] sm:$0xff]
        %v549 = vld [vmem:[#allocation8 + $0x30] sm:$0xff]
        %v550 = vld [vmem:[#allocation8 + $0x38] sm:$0xff]
        %v551 = vld [vmem:[#allocation8 + $0x40] sm:$0xff]
        %v552 = vld [vmem:[#allocation8 + $0x48] sm:$0xff]
        %v553 = vld [vmem:[#allocation8 + $0x50] sm:$0xff]
        %v554 = vld [vmem:[#allocation8 + $0x58] sm:$0xff]
        %v555 = vld [vmem:[#allocation8 + $0x60] sm:$0xff]
        %v556 = vld [vmem:[#allocation8 + $0x68] sm:$0xff]
        %v557 = vld [vmem:[#allocation8 + $0x70] sm:$0xff]
        %v558 = vld [vmem:[#allocation8 + $0x78] sm:$0xff]
        %v559 = vld [vmem:[#allocation8 + $0x80] sm:$0xff]
        %v560 = vld [vmem:[#allocation8 + $0x88] sm:$0xff]
        %v561 = vld [vmem:[#allocation8 + $0x90] sm:$0xff]
        %v562 = vld [vmem:[#allocation8 + $0x98] sm:$0xff]
        %v563 = vld [vmem:[#allocation8 + $0xa0] sm:$0xff]
        %v564 = vld [vmem:[#allocation8 + $0xa8] sm:$0xff]
        %v565 = vld [vmem:[#allocation8 + $0xb0] sm:$0xff]
        %v566 = vld [vmem:[#allocation8 + $0xb8] sm:$0xff]
        %v567 = vld [vmem:[#allocation8 + $0xc0] sm:$0xff]
        %v568 = vld [vmem:[#allocation8 + $0xc8] sm:$0xff]
        %v569 = vld [vmem:[#allocation8 + $0xd0] sm:$0xff]
        %v570 = vld [vmem:[#allocation8 + $0xd8] sm:$0xff]
        %v571 = vld [vmem:[#allocation8 + $0xe0] sm:$0xff]
        %v572 = vld [vmem:[#allocation8 + $0xe8] sm:$0xff]
        %v573 = vld [vmem:[#allocation8 + $0xf0] sm:$0xff]
        %v574 = vld [vmem:[#allocation8 + $0xf8] sm:$0xff]
        %v575 = vld [vmem:[#allocation8 + $0x100] sm:$0xff]
        %v576 = vld [vmem:[#allocation8 + $0x108] sm:$0xff]
        %v577 = vld [vmem:[#allocation8 + $0x110] sm:$0xff]
        %v578 = vld [vmem:[#allocation8 + $0x118] sm:$0xff]
        %v579 = vld [vmem:[#allocation8 + $0x120] sm:$0xff]
        %v580 = vld [vmem:[#allocation8 + $0x128] sm:$0xff]
        %v581 = vld [vmem:[#allocation8 + $0x130] sm:$0xff]
        %v582 = vld [vmem:[#allocation8 + $0x138] sm:$0xff]
        %v583 = vld [vmem:[#allocation8 + $0x140] sm:$0xff]
        %v584 = vld [vmem:[#allocation8 + $0x148] sm:$0xff]
        %v585 = vld [vmem:[#allocation8 + $0x150] sm:$0xff]
        %v586 = vld [vmem:[#allocation8 + $0x158] sm:$0xff]
        %v587 = vld [vmem:[#allocation8 + $0x160] sm:$0xff]
        %v588 = vld [vmem:[#allocation8 + $0x168] sm:$0xff]
        %v589 = vld [vmem:[#allocation8 + $0x170] sm:$0xff]
        %v590 = vld [vmem:[#allocation8 + $0x178] sm:$0xff]
        %591 = vmatprep.subr.mxu0 %v589
        %592 = vmatpush1.msra.mxu0 %v588
        %593 = vmatprep.subr.mxu0 %v586
        %594 = vmatpush1.msra.mxu0 %v585
        %595 = vmatprep.subr.mxu0 %v583
        %596 = vmatpush1.msra.mxu0 %v582
        %597 = vmatprep.subr.mxu0 %v580
        %598 = vmatpush1.msra.mxu0 %v579
        %599 = vmatprep.subr.mxu0 %v577
        %600 = vmatpush1.msra.mxu0 %v576
        %601 = vmatprep.subr.mxu0 %v574
        %602 = vmatpush1.msra.mxu0 %v573
        %603 = vmatprep.subr.mxu0 %v571
        %604 = vmatpush1.msra.mxu0 %v570
        %605 = vmatprep.subr.mxu0 %v568
        %606 = vmatpush1.msra.mxu0 %v567
        %607 = vmatprep.subr.mxu0 %v565
        %608 = vmatpush1.msra.mxu0 %v564
        %609 = vmatprep.subr.mxu0 %v562
        %610 = vmatpush1.msra.mxu0 %v561
        %611 = vmatprep.subr.mxu0 %v559
        %612 = vmatpush1.msra.mxu0 %v558
        %613 = vmatprep.subr.mxu0 %v556
        %614 = vmatpush1.msra.mxu0 %v555
        %615 = vmatprep.subr.mxu0 %v553
        %616 = vmatpush1.msra.mxu0 %v552
        %617 = vmatprep.subr.mxu0 %v550
        %618 = vmatpush1.msra.mxu0 %v549
        %619 = vmatprep.subr.mxu0 %v547
        %620 = vmatpush1.msra.mxu0 %v546
        %621 = vmatprep.subr.mxu0 %v544
        %622 = vmatpush1.msra.mxu0 %v543
        %623 = vmatprep.subr.mxu0 0.0
        %624 = vmatpush2.msra.mxu0 0.0
        %625 = vmatprep.subr.mxu0 0.0
        %626 = vmatpush2.msra.mxu0 0.0
        %627 = vmatprep.subr.mxu0 0.0
        %628 = vmatpush2.msra.mxu0 0.0
        %629 = vmatprep.subr.mxu0 0.0
        %630 = vmatpush2.msra.mxu0 0.0
        %631 = vmatprep.subr.mxu0 0.0
        %632 = vmatpush2.msra.mxu0 0.0
        %633 = vmatprep.subr.mxu0 0.0
        %634 = vmatpush2.msra.mxu0 0.0
        %635 = vmatprep.subr.mxu0 0.0
        %636 = vmatpush2.msra.mxu0 0.0
        %637 = vmatprep.subr.mxu0 0.0
        %638 = vmatpush2.msra.mxu0 0.0
        %639 = vmatprep.subr.mxu0 0.0
        %640 = vmatpush2.msra.mxu0 0.0
        %641 = vmatprep.subr.mxu0 0.0
        %642 = vmatpush2.msra.mxu0 0.0
        %643 = vmatprep.subr.mxu0 0.0
        %644 = vmatpush2.msra.mxu0 0.0
        %645 = vmatprep.subr.mxu0 0.0
        %646 = vmatpush2.msra.mxu0 0.0
        %647 = vmatprep.subr.mxu0 0.0
        %648 = vmatpush2.msra.mxu0 0.0
        %649 = vmatprep.subr.mxu0 0.0
        %650 = vmatpush2.msra.mxu0 0.0
        %651 = vmatprep.subr.mxu0 0.0
        %652 = vmatpush2.msra.mxu0 0.0
        %653 = vmatprep.subr.mxu0 0.0
        %654 = vmatpush2.msra.mxu0 0.0
        %655 = vmatprep.mubr.f32.mxu0 0.0
        %656 = vmatmul.mubr.f32.gmra.mxu0 %v494
        %v657 = vpop.f32.mrf.mxu0
        %v658 = vadd.f32 0.0, %v657
        %v659 = vpop.f32.mrf.mxu0
        %v660 = vadd.f32 0.0, %v659
        %661 = vdwg.mxu0
        %662 = vmatprep.subr.mxu0 0.0
        %663 = vmatpush1.msra.mxu0 %v590
        %664 = vmatprep.subr.mxu0 0.0
        %665 = vmatpush1.msra.mxu0 %v587
        %666 = vmatprep.subr.mxu0 0.0
        %667 = vmatpush1.msra.mxu0 %v584
        %668 = vmatprep.subr.mxu0 0.0
        %669 = vmatpush1.msra.mxu0 %v581
        %670 = vmatprep.subr.mxu0 0.0
        %671 = vmatpush1.msra.mxu0 %v578
        %672 = vmatprep.subr.mxu0 0.0
        %673 = vmatpush1.msra.mxu0 %v575
        %674 = vmatprep.subr.mxu0 0.0
        %675 = vmatpush1.msra.mxu0 %v572
        %676 = vmatprep.subr.mxu0 0.0
        %677 = vmatpush1.msra.mxu0 %v569
        %678 = vmatprep.subr.mxu0 0.0
        %679 = vmatpush1.msra.mxu0 %v566
        %680 = vmatprep.subr.mxu0 0.0
        %681 = vmatpush1.msra.mxu0 %v563
        %682 = vmatprep.subr.mxu0 0.0
        %683 = vmatpush1.msra.mxu0 %v560
        %684 = vmatprep.subr.mxu0 0.0
        %685 = vmatpush1.msra.mxu0 %v557
        %686 = vmatprep.subr.mxu0 0.0
        %687 = vmatpush1.msra.mxu0 %v554
        %688 = vmatprep.subr.mxu0 0.0
        %689 = vmatpush1.msra.mxu0 %v551
        %690 = vmatprep.subr.mxu0 0.0
        %691 = vmatpush1.msra.mxu0 %v548
        %692 = vmatprep.subr.mxu0 0.0
        %693 = vmatpush1.msra.mxu0 %v545
        %694 = vmatprep.subr.mxu0 0.0
        %695 = vmatpush2.msra.mxu0 0.0
        %696 = vmatprep.subr.mxu0 0.0
        %697 = vmatpush2.msra.mxu0 0.0
        %698 = vmatprep.subr.mxu0 0.0
        %699 = vmatpush2.msra.mxu0 0.0
        %700 = vmatprep.subr.mxu0 0.0
        %701 = vmatpush2.msra.mxu0 0.0
        %702 = vmatprep.subr.mxu0 0.0
        %703 = vmatpush2.msra.mxu0 0.0
        %704 = vmatprep.subr.mxu0 0.0
        %705 = vmatpush2.msra.mxu0 0.0
        %706 = vmatprep.subr.mxu0 0.0
        %707 = vmatpush2.msra.mxu0 0.0
        %708 = vmatprep.subr.mxu0 0.0
        %709 = vmatpush2.msra.mxu0 0.0
        %710 = vmatprep.subr.mxu0 0.0
        %711 = vmatpush2.msra.mxu0 0.0
        %712 = vmatprep.subr.mxu0 0.0
        %713 = vmatpush2.msra.mxu0 0.0
        %714 = vmatprep.subr.mxu0 0.0
        %715 = vmatpush2.msra.mxu0 0.0
        %716 = vmatprep.subr.mxu0 0.0
        %717 = vmatpush2.msra.mxu0 0.0
        %718 = vmatprep.subr.mxu0 0.0
        %719 = vmatpush2.msra.mxu0 0.0
        %720 = vmatprep.subr.mxu0 0.0
        %721 = vmatpush2.msra.mxu0 0.0
        %722 = vmatprep.subr.mxu0 0.0
        %723 = vmatpush2.msra.mxu0 0.0
        %724 = vmatprep.subr.mxu0 0.0
        %725 = vmatpush2.msra.mxu0 0.0
        %726 = vmatprep.mubr.f32.mxu0 0.0
        %727 = vmatmul.mubr.f32.gmra.mxu0 %v494
        %v728 = vpop.f32.mrf.mxu0
        %v729 = vadd.f32 0.0, %v728
        %v730 = vpop.f32.mrf.mxu0
        %731 = vdwg.mxu0
        %732 = vmatprep.subr.mxu0 %v541
        %733 = vmatpush1.msra.mxu0 %v540
        %734 = vmatprep.subr.mxu0 %v538
        %735 = vmatpush1.msra.mxu0 %v537
        %736 = vmatprep.subr.mxu0 %v535
        %737 = vmatpush1.msra.mxu0 %v534
        %738 = vmatprep.subr.mxu0 %v532
        %739 = vmatpush1.msra.mxu0 %v531
        %740 = vmatprep.subr.mxu0 %v529
        %741 = vmatpush1.msra.mxu0 %v528
        %742 = vmatprep.subr.mxu0 %v526
        %743 = vmatpush1.msra.mxu0 %v525
        %744 = vmatprep.subr.mxu0 %v523
        %745 = vmatpush1.msra.mxu0 %v522
        %746 = vmatprep.subr.mxu0 %v520
        %747 = vmatpush1.msra.mxu0 %v519
        %748 = vmatprep.subr.mxu0 %v517
        %749 = vmatpush1.msra.mxu0 %v516
        %750 = vmatprep.subr.mxu0 %v514
        %751 = vmatpush1.msra.mxu0 %v513
        %752 = vmatprep.subr.mxu0 %v511
        %753 = vmatpush1.msra.mxu0 %v510
        %754 = vmatprep.subr.mxu0 %v508
        %755 = vmatpush1.msra.mxu0 %v507
        %756 = vmatprep.subr.mxu0 %v505
        %757 = vmatpush1.msra.mxu0 %v504
        %758 = vmatprep.subr.mxu0 %v502
        %759 = vmatpush1.msra.mxu0 %v501
        %760 = vmatprep.subr.mxu0 %v499
        %761 = vmatpush1.msra.mxu0 %v498
        %762 = vmatprep.subr.mxu0 %v496
        %763 = vmatpush1.msra.mxu0 %v495
        %764 = vmatprep.subr.mxu0 0.0
        %765 = vmatpush2.msra.mxu0 0.0
        %766 = vmatprep.subr.mxu0 0.0
        %767 = vmatpush2.msra.mxu0 0.0
        %768 = vmatprep.subr.mxu0 0.0
        %769 = vmatpush2.msra.mxu0 0.0
        %770 = vmatprep.subr.mxu0 0.0
        %771 = vmatpush2.msra.mxu0 0.0
        %772 = vmatprep.subr.mxu0 0.0
        %773 = vmatpush2.msra.mxu0 0.0
        %774 = vmatprep.subr.mxu0 0.0
        %775 = vmatpush2.msra.mxu0 0.0
        %776 = vmatprep.subr.mxu0 0.0
        %777 = vmatpush2.msra.mxu0 0.0
        %778 = vmatprep.subr.mxu0 0.0
        %779 = vmatpush2.msra.mxu0 0.0
        %780 = vmatprep.subr.mxu0 0.0
        %781 = vmatpush2.msra.mxu0 0.0
        %782 = vmatprep.subr.mxu0 0.0
        %783 = vmatpush2.msra.mxu0 0.0
        %784 = vmatprep.subr.mxu0 0.0
        %785 = vmatpush2.msra.mxu0 0.0
        %786 = vmatprep.subr.mxu0 0.0
        %787 = vmatpush2.msra.mxu0 0.0
        %788 = vmatprep.subr.mxu0 0.0
        %789 = vmatpush2.msra.mxu0 0.0
        %790 = vmatprep.subr.mxu0 0.0
        %791 = vmatpush2.msra.mxu0 0.0
        %792 = vmatprep.subr.mxu0 0.0
        %793 = vmatpush2.msra.mxu0 0.0
        %794 = vmatprep.subr.mxu0 0.0
        %795 = vmatpush2.msra.mxu0 0.0
        %796 = vmatprep.mubr.f32.mxu0 0.0
        %797 = vmatmul.mubr.f32.gmra.mxu0 %v493
        %v798 = vpop.f32.mrf.mxu0
        %v799 = vadd.f32 %v658, %v798
        %v800 = vpop.f32.mrf.mxu0
        %v801 = vadd.f32 %v660, %v800
        %802 = vdwg.mxu0
        %803 = vmatprep.subr.mxu0 0.0
        %804 = vmatpush1.msra.mxu0 %v542
        %805 = vmatprep.subr.mxu0 0.0
        %806 = vmatpush1.msra.mxu0 %v539
        %807 = vmatprep.subr.mxu0 0.0
        %808 = vmatpush1.msra.mxu0 %v536
        %809 = vmatprep.subr.mxu0 0.0
        %810 = vmatpush1.msra.mxu0 %v533
        %811 = vmatprep.subr.mxu0 0.0
        %812 = vmatpush1.msra.mxu0 %v530
        %813 = vmatprep.subr.mxu0 0.0
        %814 = vmatpush1.msra.mxu0 %v527
        %815 = vmatprep.subr.mxu0 0.0
        %816 = vmatpush1.msra.mxu0 %v524
        %817 = vmatprep.subr.mxu0 0.0
        %818 = vmatpush1.msra.mxu0 %v521
        %819 = vmatprep.subr.mxu0 0.0
        %820 = vmatpush1.msra.mxu0 %v518
        %821 = vmatprep.subr.mxu0 0.0
        %822 = vmatpush1.msra.mxu0 %v515
        %823 = vmatprep.subr.mxu0 0.0
        %824 = vmatpush1.msra.mxu0 %v512
        %825 = vmatprep.subr.mxu0 0.0
        %826 = vmatpush1.msra.mxu0 %v509
        %827 = vmatprep.subr.mxu0 0.0
        %828 = vmatpush1.msra.mxu0 %v506
        %829 = vmatprep.subr.mxu0 0.0
        %830 = vmatpush1.msra.mxu0 %v503
        %831 = vmatprep.subr.mxu0 0.0
        %832 = vmatpush1.msra.mxu0 %v500
        %833 = vmatprep.subr.mxu0 0.0
        %834 = vmatpush1.msra.mxu0 %v497
        %835 = vmatprep.subr.mxu0 0.0
        %836 = vmatpush2.msra.mxu0 0.0
        %837 = vmatprep.subr.mxu0 0.0
        %838 = vmatpush2.msra.mxu0 0.0
        %839 = vmatprep.subr.mxu0 0.0
        %840 = vmatpush2.msra.mxu0 0.0
        %841 = vmatprep.subr.mxu0 0.0
        %842 = vmatpush2.msra.mxu0 0.0
        %843 = vmatprep.subr.mxu0 0.0
        %844 = vmatpush2.msra.mxu0 0.0
        %845 = vmatprep.subr.mxu0 0.0
        %846 = vmatpush2.msra.mxu0 0.0
        %847 = vmatprep.subr.mxu0 0.0
        %848 = vmatpush2.msra.mxu0 0.0
        %849 = vmatprep.subr.mxu0 0.0
        %850 = vmatpush2.msra.mxu0 0.0
        %851 = vmatprep.subr.mxu0 0.0
        %852 = vmatpush2.msra.mxu0 0.0
        %853 = vmatprep.subr.mxu0 0.0
        %854 = vmatpush2.msra.mxu0 0.0
        %855 = vmatprep.subr.mxu0 0.0
        %856 = vmatpush2.msra.mxu0 0.0
        %857 = vmatprep.subr.mxu0 0.0
        %858 = vmatpush2.msra.mxu0 0.0
        %859 = vmatprep.subr.mxu0 0.0
        %860 = vmatpush2.msra.mxu0 0.0
        %861 = vmatprep.subr.mxu0 0.0
        %862 = vmatpush2.msra.mxu0 0.0
        %863 = vmatprep.subr.mxu0 0.0
        %864 = vmatpush2.msra.mxu0 0.0
        %865 = vmatprep.subr.mxu0 0.0
        %866 = vmatpush2.msra.mxu0 0.0
        %867 = vmatprep.mubr.f32.mxu0 0.0
        %868 = vmatmul.mubr.f32.gmra.mxu0 %v493
        %v869 = vpop.f32.mrf.mxu0
        %v870 = vadd.f32 %v729, %v869
        %v871 = vpop.f32.mrf.mxu0
        %872 = vdwg.mxu0
        %v873 = vld [vmem:[%s7] sm:$0x7]
        %v875 = vlaneseq
        %v876 = vshrl.u32 %v875, 7
        %v877 = vsub.s32 0, %v876
        %v878 = vrot.slane %v873, %v877
        %v879 = vlaneseq
        %v880 = vshrl.u32 %v879, 7
        %v881 = vsub.s32 1, %v880
        %v882 = vrot.slane %v873, %v881
        %v883 = vlaneseq
        %v884 = vshrl.u32 %v883, 7
        %v885 = vsub.s32 2, %v884
        %v886 = vrot.slane %v873, %v885
        %v890 = vadd.f32 %v799, %v878
        %v891 = vadd.f32 %v801, %v882
        %v892 = vadd.f32 %v870, %v886
        %v893 = vxor.u32 %v892, 2147483648
        %v894 = vmul.f32 %v893, 1.442695
        %v895 = vpow.pop %v894
        %v896 = vadd.f32 %v895, 1.0
        %v897 = vrcp.pop %v896
        %v898 = vmul.f32 1.0, %v897
        %v899 = vld [vmem:[%s2] sm:$0x1]
        %v901 = vlaneseq
        %v902 = vshrl.u32 %v901, 7
        %v903 = vsub.s32 0, %v902
        %v904 = vrot.slane %v899, %v903
        %v906 = vmul.f32 %v904, %v493
        %v907 = vld [vmem:[%s3] sm:$0x1]
        %v909 = vlaneseq
        %v910 = vshrl.u32 %v909, 7
        %v911 = vsub.s32 0, %v910
        %v912 = vrot.slane %v907, %v911
        %v914 = vmul.f32 %v912, %v494
        %v915 = vadd.f32 %v906, %v914
        %v916 = vld [vmem:[%s4] sm:$0x1]
        %v918 = vlaneseq
        %v919 = vshrl.u32 %v918, 7
        %v920 = vsub.s32 0, %v919
        %v921 = vrot.slane %v916, %v920
        %v923 = vadd.f32 %v915, %v921
        %v924 = vmax.f32 %v890, 0.0
        %v925 = vmax.f32 %v891, 0.0
        %v926 = vld [vmem:[#allocation10] sm:$0xff]
        %v927 = vld [vmem:[#allocation10 + $0x8] sm:$0xff]
        %v928 = vld [vmem:[#allocation10 + $0x10] sm:$0xff]
        %v929 = vld [vmem:[#allocation10 + $0x18] sm:$0xff]
        %v930 = vld [vmem:[#allocation10 + $0x20] sm:$0xff]
        %v931 = vld [vmem:[#allocation10 + $0x28] sm:$0xff]
        %v932 = vld [vmem:[#allocation10 + $0x30] sm:$0xff]
        %v933 = vld [vmem:[#allocation10 + $0x38] sm:$0xff]
        %v934 = vld [vmem:[#allocation10 + $0x40] sm:$0xff]
        %v935 = vld [vmem:[#allocation10 + $0x48] sm:$0xff]
        %v936 = vld [vmem:[#allocation10 + $0x50] sm:$0xff]
        %v937 = vld [vmem:[#allocation10 + $0x58] sm:$0xff]
        %v938 = vld [vmem:[#allocation10 + $0x60] sm:$0xff]
        %v939 = vld [vmem:[#allocation10 + $0x68] sm:$0xff]
        %v940 = vld [vmem:[#allocation10 + $0x70] sm:$0xff]
        %v941 = vld [vmem:[#allocation10 + $0x78] sm:$0xff]
        %v942 = vld [vmem:[#allocation10 + $0x80] sm:$0xff]
        %v943 = vld [vmem:[#allocation10 + $0x88] sm:$0xff]
        %v944 = vld [vmem:[#allocation10 + $0x90] sm:$0xff]
        %v945 = vld [vmem:[#allocation10 + $0x98] sm:$0xff]
        %v946 = vld [vmem:[#allocation10 + $0xa0] sm:$0xff]
        %v947 = vld [vmem:[#allocation10 + $0xa8] sm:$0xff]
        %v948 = vld [vmem:[#allocation10 + $0xb0] sm:$0xff]
        %v949 = vld [vmem:[#allocation10 + $0xb8] sm:$0xff]
        %v950 = vld [vmem:[#allocation10 + $0xc0] sm:$0xff]
        %v951 = vld [vmem:[#allocation10 + $0xc8] sm:$0xff]
        %v952 = vld [vmem:[#allocation10 + $0xd0] sm:$0xff]
        %v953 = vld [vmem:[#allocation10 + $0xd8] sm:$0xff]
        %v954 = vld [vmem:[#allocation10 + $0xe0] sm:$0xff]
        %v955 = vld [vmem:[#allocation10 + $0xe8] sm:$0xff]
        %v956 = vld [vmem:[#allocation10 + $0xf0] sm:$0xff]
        %v957 = vld [vmem:[#allocation10 + $0xf8] sm:$0xff]
        %v958 = vld [vmem:[%s9] sm:$0x1]
        %v960 = vlaneseq
        %v961 = vshrl.u32 %v960, 7
        %v962 = vsub.s32 0, %v961
        %v963 = vrot.slane %v958, %v962
        %965 = vmatprep.subr.mxu0 0.0
        %966 = vmatpush1.msra.mxu0 %v941
        %967 = vmatprep.subr.mxu0 0.0
        %968 = vmatpush1.msra.mxu0 %v940
        %969 = vmatprep.subr.mxu0 0.0
        %970 = vmatpush1.msra.mxu0 %v939
        %971 = vmatprep.subr.mxu0 0.0
        %972 = vmatpush1.msra.mxu0 %v938
        %973 = vmatprep.subr.mxu0 0.0
        %974 = vmatpush1.msra.mxu0 %v937
        %975 = vmatprep.subr.mxu0 0.0
        %976 = vmatpush1.msra.mxu0 %v936
        %977 = vmatprep.subr.mxu0 0.0
        %978 = vmatpush1.msra.mxu0 %v935
        %979 = vmatprep.subr.mxu0 0.0
        %980 = vmatpush1.msra.mxu0 %v934
        %981 = vmatprep.subr.mxu0 0.0
        %982 = vmatpush1.msra.mxu0 %v933
        %983 = vmatprep.subr.mxu0 0.0
        %984 = vmatpush1.msra.mxu0 %v932
        %985 = vmatprep.subr.mxu0 0.0
        %986 = vmatpush1.msra.mxu0 %v931
        %987 = vmatprep.subr.mxu0 0.0
        %988 = vmatpush1.msra.mxu0 %v930
        %989 = vmatprep.subr.mxu0 0.0
        %990 = vmatpush1.msra.mxu0 %v929
        %991 = vmatprep.subr.mxu0 0.0
        %992 = vmatpush1.msra.mxu0 %v928
        %993 = vmatprep.subr.mxu0 0.0
        %994 = vmatpush1.msra.mxu0 %v927
        %995 = vmatprep.subr.mxu0 0.0
        %996 = vmatpush1.msra.mxu0 %v926
        %997 = vmatprep.subr.mxu0 0.0
        %998 = vmatpush2.msra.mxu0 %v957
        %999 = vmatprep.subr.mxu0 0.0
        %1000 = vmatpush2.msra.mxu0 %v956
        %1001 = vmatprep.subr.mxu0 0.0
        %1002 = vmatpush2.msra.mxu0 %v955
        %1003 = vmatprep.subr.mxu0 0.0
        %1004 = vmatpush2.msra.mxu0 %v954
        %1005 = vmatprep.subr.mxu0 0.0
        %1006 = vmatpush2.msra.mxu0 %v953
        %1007 = vmatprep.subr.mxu0 0.0
        %1008 = vmatpush2.msra.mxu0 %v952
        %1009 = vmatprep.subr.mxu0 0.0
        %1010 = vmatpush2.msra.mxu0 %v951
        %1011 = vmatprep.subr.mxu0 0.0
        %1012 = vmatpush2.msra.mxu0 %v950
        %1013 = vmatprep.subr.mxu0 0.0
        %1014 = vmatpush2.msra.mxu0 %v949
        %1015 = vmatprep.subr.mxu0 0.0
        %1016 = vmatpush2.msra.mxu0 %v948
        %1017 = vmatprep.subr.mxu0 0.0
        %1018 = vmatpush2.msra.mxu0 %v947
        %1019 = vmatprep.subr.mxu0 0.0
        %1020 = vmatpush2.msra.mxu0 %v946
        %1021 = vmatprep.subr.mxu0 0.0
        %1022 = vmatpush2.msra.mxu0 %v945
        %1023 = vmatprep.subr.mxu0 0.0
        %1024 = vmatpush2.msra.mxu0 %v944
        %1025 = vmatprep.subr.mxu0 0.0
        %1026 = vmatpush2.msra.mxu0 %v943
        %1027 = vmatprep.subr.mxu0 0.0
        %1028 = vmatpush2.msra.mxu0 %v942
        %1029 = vmatprep.mubr.f32.mxu0 %v925
        %1030 = vmatmul.mubr.f32.gmra.mxu0 %v924
        %v1031 = vpop.f32.mrf.mxu0
        %v1032 = vadd.f32 %v963, %v1031
        %v1033 = vpop.f32.mrf.mxu0
        %1034 = vdwg.mxu0
        %v1035 = vtanh.pop %v1032
        %v1036 = vsub.f32 %v923, %v1035
        %v1037 = vmul.f32 %v898, %v1036
        %v1038 = vadd.f32 %v1035, %v1037
        %1039 = vst [vmem:[%s485] sm:$0xff] %v1038
        %1040 = vst [vmem:[%s492] sm:$0xff] %v898
        %s1041 = sand.u32 %s264, 1
        %s1042 = scalar_lea.sflag [#allocation4], %s1041
        %s1043 = sand.u32 %s264, 1
        %s1044 = smul.addr %s1043, 8
        %s1045 = scalar_lea.vmem [#allocation11], %s1044
        %s1046 = sand.u32 %s290, 1
        %s1047 = scalar_lea.sflag [#allocation13], %s1046
        %s1048 = sand.u32 %s290, 1
        %s1049 = smul.addr %s1048, 8
        %s1050 = scalar_lea.vmem [#allocation12], %s1049
        // Predicated region
        $region81: #{tpu_custom_call.1} parent=59 // pred_check
          %p1051 = pneg %p274
        $region82: #{tpu_custom_call.1} parent=59 // pred_check_branch
          %1053 = sbr.rel (%p1051) target = $region84
        $region83: #{tpu_custom_call.1} parent=59 // pred_region
          %s1055 = ssub.s32 128, 128
          %1056 = vsyncadd %s1042, %s1055
          %s1057 = smul.addr %s36, 128
          %s1058 = scalar_lea.hbm %s10, %s1057
          %s1060 = sshll.u32 %s1045, 4
          %s1061 = int_to_ptr.vmem [resolvable:$true] %s1060
          %1063 = dma.vmem_to_hbm [thread:$0]  %s1061, 128, %s1058, %s1042
        $region84: #{tpu_custom_call.1} parent=59 // pred_fallthru
          _
        // Predicated region
        $region85: #{tpu_custom_call.1} parent=59 // pred_check
          %p1064 = pneg %p300
        $region86: #{tpu_custom_call.1} parent=59 // pred_check_branch
          %1066 = sbr.rel (%p1064) target = $region88
        $region87: #{tpu_custom_call.1} parent=59 // pred_region
          %s1068 = ssub.s32 128, 128
          %1069 = vsyncadd %s1047, %s1068
          %s1070 = smul.addr %s36, 128
          %s1071 = scalar_lea.hbm %s11, %s1070
          %s1073 = sshll.u32 %s1050, 4
          %s1074 = int_to_ptr.vmem [resolvable:$true] %s1073
          %1076 = dma.vmem_to_hbm [thread:$0]  %s1074, 128, %s1071, %s1047
        $region88: #{tpu_custom_call.1} parent=59 // pred_fallthru
          _
      $region60: #{tpu_custom_call.1} parent=5 // pred_fallthru
        _
      %p1077 = scmp.le.s32.totalorder 2, %s31
      // Predicated region
      $region89: #{tpu_custom_call.1} parent=5 // pred_check
        %p1078 = pneg %p1077
      $region90: #{tpu_custom_call.1} parent=5 // pred_check_branch
        %1080 = sbr.rel (%p1078) target = $region92
      $region91: #{tpu_custom_call.1} parent=5 // pred_region
        %s1081 = ssub.s32 %s31, 2
        // Predicated region
        $region93: #{tpu_custom_call.1} parent=91 // pred_check
          %p1082 = pneg %p280
        $region94: #{tpu_custom_call.1} parent=91 // pred_check_branch
          %1084 = sbr.rel (%p1082) target = $region96
        $region95: #{tpu_custom_call.1} parent=91 // pred_region
          %s1085 = sand.u32 %s265, 1
          %s1086 = scalar_lea.sflag [#allocation4], %s1085
          %s1087 = sand.u32 %s265, 1
          %s1088 = smul.addr %s1087, 8
          %s1089 = scalar_lea.vmem [#allocation11], %s1088
          %1090 = dma.done %s1086, 128
        $region96: #{tpu_custom_call.1} parent=91 // pred_fallthru
          _
        // Predicated region
        $region97: #{tpu_custom_call.1} parent=91 // pred_check
          %p1091 = pneg %p306
        $region98: #{tpu_custom_call.1} parent=91 // pred_check_branch
          %1093 = sbr.rel (%p1091) target = $region100
        $region99: #{tpu_custom_call.1} parent=91 // pred_region
          %s1094 = sand.u32 %s291, 1
          %s1095 = scalar_lea.sflag [#allocation13], %s1094
          %s1096 = sand.u32 %s291, 1
          %s1097 = smul.addr %s1096, 8
          %s1098 = scalar_lea.vmem [#allocation12], %s1097
          %1099 = dma.done %s1095, 128
        $region100: #{tpu_custom_call.1} parent=91 // pred_fallthru
          _
      $region92: #{tpu_custom_call.1} parent=5 // pred_fallthru
        _
    $region6: #{tpu_custom_call.1} parent=1 // loop_footer
      %s35 = sadd.s32 1, %s31
    $region7: #{tpu_custom_call.1} parent=1 // loop_footer_branch
      %30 = sbr.rel target = $region3
    $region8: #{tpu_custom_call.1} parent=1 // loop_exit
      _
    %1100 = vsyncpa [#allocation3], 1
    %s1101 = scalar_lea.sflag [#allocation3], 1
    %1102 = vsyncpa %s1101, 1
    %1103 = vsyncpa [#allocation6], 1
    %s1104 = scalar_lea.sflag [#allocation6], 1
    %1105 = vsyncpa %s1104, 1
    %1106 = vsyncpa [#allocation9], 1
    %1107 = vsyncpa [#allocation4], 1
    %s1108 = scalar_lea.sflag [#allocation4], 1
    %1109 = vsyncpa %s1108, 1
    %1110 = vsyncpa [#allocation13], 1
    %s1111 = scalar_lea.sflag [#allocation13], 1
    %1112 = vsyncpa %s1111, 1

</llo_original>
